<compile_context>
chip_gen: v6e
topology: v6e:2x2x1
jax: 0.10.0
libtpu: 0.0.40
codegen_flags: <defaults>
</compile_context>

<pallas_src>
import jax
import jax.numpy as jnp
from jax import lax
from jax.experimental import pallas as pl
from jax.experimental.pallas import tpu as pltpu


def _cdiv(a, b):
    return (a + b - 1) // b


def _round_up(a, b):
    return _cdiv(a, b) * b


def _lm_gather_kernel(inp_ref, tgt_ref, out_ref):
    """One (b, t, v) grid step.

    inp_ref: (1, T_TILE, V_TILE) log-probs (f32 or bf16)
    tgt_ref: (1, T_TILE, 1) int32 targets
    out_ref: (1, T_TILE, 1) f32 per-row gathered log-prob, resident across V.
    """
    v = pl.program_id(2)
    v_tile = inp_ref.shape[2]

    @pl.when(v == 0)
    def _():
        out_ref[...] = jnp.zeros_like(out_ref)

    logp = inp_ref[0]                          # (T_TILE, V_TILE)
    local_tgt = tgt_ref[0] - v * v_tile        # (T_TILE, 1) int32

    # (1, V_TILE) lane iota; the compare broadcasts it across sublanes — no
    # full (T_TILE, V_TILE) iota is materialized.
    ids = lax.broadcasted_iota(jnp.int32, (1, v_tile), 1)

    # At most one lane per row matches, so summing the select is an exact
    # gather even in bf16; cast only the narrow (T, 1) partial to f32.
    partial = jnp.sum(jnp.where(ids == local_tgt, logp, 0.0),
                      axis=1, keepdims=True).astype(jnp.float32)

    out_ref[0] += partial


def language_model_criterion(inp, target, mask, *, t_tile_max=256, v_tile_max=4096):
    """inp: (B, T, V) log-probs; target: (B, T_full) int; mask: (B, T_full) float."""
    B, T, V = inp.shape
    tgt = target[:, :T].astype(jnp.int32)          # (B, T)
    msk = mask[:, :T].astype(jnp.float32)          # (B, T)

    t_tile_max = _round_up(max(t_tile_max, 8), 8)
    v_tile_max = _round_up(max(v_tile_max, 128), 128)

    # Full dim if it fits in one tile, otherwise the max tile with a ragged
    # last block (never a tiny aligned divisor).
    t_tile = T if T <= t_tile_max else t_tile_max
    v_tile = V if V <= v_tile_max else v_tile_max

    # v7x megacore: ensure the combined parallel extent B * ceil(T/t_tile) is
    # at least 2 so both TensorCores get shards.
    if B * _cdiv(T, t_tile) < 2 and T >= 16:
        t_tile = _round_up(_cdiv(T, 2), 8)

    grid = (B, _cdiv(T, t_tile), _cdiv(V, v_tile))

    itemsize = inp.dtype.itemsize
    compiler_kwargs = dict(
        dimension_semantics=("parallel", "parallel", "arbitrary"))
    # Only raise the scoped-VMEM limit when the requested tiles need it; the
    # default tiles fit every generation's default scoped limit.
    vmem_needed = 2 * t_tile * v_tile * itemsize + (2 << 20)
    if vmem_needed > (16 << 20):
        compiler_kwargs["vmem_limit_bytes"] = min(vmem_needed, 56 << 20)

    loss_rows = pl.pallas_call(
        _lm_gather_kernel,
        out_shape=jax.ShapeDtypeStruct((B, T, 1), jnp.float32),
        grid_spec=pltpu.PrefetchScalarGridSpec(
            num_scalar_prefetch=0,
            grid=grid,
            in_specs=[
                pl.BlockSpec((1, t_tile, v_tile), lambda b, t, v: (b, t, v)),
                pl.BlockSpec((1, t_tile, 1), lambda b, t, v: (b, t, 0)),
            ],
            out_specs=pl.BlockSpec((1, t_tile, 1), lambda b, t, v: (b, t, 0)),
        ),
        compiler_params=pltpu.CompilerParams(**compiler_kwargs),
        cost_estimate=pl.CostEstimate(
            flops=3 * B * T * V,
            transcendentals=0,
            bytes_accessed=B * T * V * itemsize + 2 * B * T * 4),
    )(inp, tgt[:, :, None])

    # Mask + sign + divide on tiny (B, T) data in plain JAX (linear, so doing
    # it once outside the V loop is exact).  NaN if sum(mask)==0, as in torch.
    total_logp = jnp.sum(loss_rows[:, :, 0] * msk)
    total_mask = jnp.sum(msk)
    return -total_logp / total_mask


def _reference(inp, target, mask):
    T = inp.shape[1]
    tgt = target[:, :T].astype(jnp.int32)
    msk = mask[:, :T].astype(inp.dtype)
    gathered = jnp.take_along_axis(inp, tgt[:, :, None], axis=2)[:, :, 0]
    return jnp.sum(-gathered * msk) / jnp.sum(msk)


if __name__ == "__main__":
    key = jax.random.PRNGKey(0)
    ks = jax.random.split(key, 9)

    # --- Test 1: small shapes, single tile per batch row ---
    B, T, T_full, V = 2, 8, 10, 32
    logits = jax.random.normal(ks[0], (B, T, V), dtype=jnp.float32)
    inp = jax.nn.log_softmax(logits, axis=-1)
    target = jax.random.randint(ks[1], (B, T_full), 0, V, dtype=jnp.int32)
    mask = (jax.random.uniform(ks[2], (B, T_full)) > 0.3).astype(jnp.float32)
    mask = mask.at[:, 0].set(1.0)           # ensure sum(mask) > 0

    out = language_model_criterion(inp, target, mask)
    jax.block_until_ready(out)
    ref = _reference(inp, target, mask)
    assert jnp.allclose(out, ref, atol=1e-5, rtol=1e-5), (out, ref)

    # --- Test 2: multi-tile grid with ragged T and V last blocks ---
    B2, T2, T2_full, V2 = 2, 12, 14, 160
    logits2 = jax.random.normal(ks[3], (B2, T2, V2), dtype=jnp.float32)
    inp2 = jax.nn.log_softmax(logits2, axis=-1)
    target2 = jax.random.randint(ks[4], (B2, T2_full), 0, V2, dtype=jnp.int32)
    mask2 = (jax.random.uniform(ks[5], (B2, T2_full)) > 0.3).astype(jnp.float32)
    mask2 = mask2.at[:, 0].set(1.0)

    out2 = language_model_criterion(inp2, target2, mask2,
                                    t_tile_max=8, v_tile_max=128)
    jax.block_until_ready(out2)
    ref2 = _reference(inp2, target2, mask2)
    assert jnp.allclose(out2, ref2, atol=1e-5, rtol=1e-5), (out2, ref2)

    # --- Test 3: B == 1 path (T split for megacore) + non-128-multiple V ---
    B3, T3, T3_full, V3 = 1, 32, 32, 300
    logits3 = jax.random.normal(ks[6], (B3, T3, V3), dtype=jnp.float32)
    inp3 = jax.nn.log_softmax(logits3, axis=-1)
    target3 = jax.random.randint(ks[7], (B3, T3_full), 0, V3, dtype=jnp.int32)
    mask3 = (jax.random.uniform(ks[8], (B3, T3_full)) > 0.3).astype(jnp.float32)
    mask3 = mask3.at[:, 0].set(1.0)

    out3 = language_model_criterion(inp3, target3, mask3)
    jax.block_until_ready(out3)
    ref3 = _reference(inp3, target3, mask3)
    assert jnp.allclose(out3, ref3, atol=1e-5, rtol=1e-5), (out3, ref3)

    print("KERNEL_OK")
</pallas_src>

<mosaic_0001>
module attributes {stable_mosaic.version = 11 : i64} {
  func.func @_lm_gather_kernel(%arg0: i32, %arg1: i32, %arg2: i32, %arg3: memref<1x8x32xf32, #tpu.memory_space<vmem>>, %arg4: memref<1x8x1xi32, #tpu.memory_space<vmem>>, %arg5: memref<1x8x1xf32, #tpu.memory_space<vmem>>) attributes {dimension_semantics = [#tpu.dimension_semantics<parallel>, #tpu.dimension_semantics<parallel>, #tpu.dimension_semantics<arbitrary>], iteration_bounds = array<i64: 2, 1, 1>, scalar_prefetch = 0 : i64, scratch_operands = 0 : i64, tpu.core_type = #tpu.core_type<tc>, window_params = [{transform_indices = @transform_0, window_bounds = array<i64: 1, 8, 32>}, {transform_indices = @transform_1, window_bounds = array<i64: 1, 8, 1>}, {transform_indices = @transform_2, window_bounds = array<i64: 1, 8, 1>}]} {
    %c0_i32 = arith.constant 0 : i32
    %0 = arith.cmpi eq, %arg2, %c0_i32 : i32
    %1 = arith.extui %0 : i1 to i32
    %c0_i32_0 = arith.constant 0 : i32
    %2 = arith.cmpi ne, %1, %c0_i32_0 : i32
    scf.if %2 {
      %cst_13 = arith.constant 0.000000e+00 : f32
      %24 = vector.broadcast %cst_13 : f32 to vector<1x8x1xf32>
      %c0_14 = arith.constant 0 : index
      %c0_15 = arith.constant 0 : index
      %c0_16 = arith.constant 0 : index
      %25 = vector.load %arg5[%c0_14, %c0_15, %c0_16] : memref<1x8x1xf32, #tpu.memory_space<vmem>>, vector<1x8x1xf32>
      tpu.vector_store %arg5[%c0_14, %c0_15, %c0_16], %24 {strides = array<i32>} : memref<1x8x1xf32, #tpu.memory_space<vmem>>, vector<1x8x1xf32>,
    } else {
    }
    %c0 = arith.constant 0 : index
    %c0_1 = arith.constant 0 : index
    %c0_2 = arith.constant 0 : index
    %3 = vector.load %arg3[%c0, %c0_1, %c0_2] : memref<1x8x32xf32, #tpu.memory_space<vmem>>, vector<1x8x32xf32>
    %4 = vector.shape_cast %3 : vector<1x8x32xf32> to vector<8x32xf32>
    %c0_3 = arith.constant 0 : index
    %c0_4 = arith.constant 0 : index
    %c0_5 = arith.constant 0 : index
    %5 = vector.load %arg4[%c0_3, %c0_4, %c0_5] : memref<1x8x1xi32, #tpu.memory_space<vmem>>, vector<1x8x1xi32>
    %6 = vector.shape_cast %5 : vector<1x8x1xi32> to vector<8x1xi32>
    %c32_i32 = arith.constant 32 : i32
    %7 = arith.muli %arg2, %c32_i32 : i32
    %8 = vector.broadcast %7 : i32 to vector<8x1xi32>
    %9 = arith.subi %6, %8 : vector<8x1xi32>
    %10 = tpu.iota {dimensions = array<i32: 1>} : vector<1x32xi32>
    %11 = vector.broadcast %10 : vector<1x32xi32> to vector<8x32xi32>
    %12 = vector.broadcast %9 : vector<8x1xi32> to vector<8x32xi32>
    %13 = arith.cmpi eq, %11, %12 : vector<8x32xi32>
    %cst = arith.constant 0.000000e+00 : f32
    %14 = vector.broadcast %cst : f32 to vector<8x32xf32>
    %15 = arith.select %13, %4, %14 : vector<8x32xi1>, vector<8x32xf32>
    %cst_6 = arith.constant dense<0.000000e+00> : vector<8xf32>
    %16 = vector.multi_reduction <add>, %15, %cst_6 [1] : vector<8x32xf32> to vector<8xf32>
    %17 = vector.shape_cast %16 : vector<8xf32> to vector<8x1xf32>
    %c0_7 = arith.constant 0 : index
    %c0_8 = arith.constant 0 : index
    %c0_9 = arith.constant 0 : index
    %18 = vector.load %arg5[%c0_7, %c0_8, %c0_9] : memref<1x8x1xf32, #tpu.memory_space<vmem>>, vector<1x8x1xf32>
    %19 = vector.shape_cast %18 : vector<1x8x1xf32> to vector<8x1xf32>
    %20 = arith.addf %19, %17 : vector<8x1xf32>
    %c0_10 = arith.constant 0 : index
    %c0_11 = arith.constant 0 : index
    %c0_12 = arith.constant 0 : index
    %21 = vector.load %arg5[%c0_10, %c0_11, %c0_12] : memref<1x8x1xf32, #tpu.memory_space<vmem>>, vector<1x8x1xf32>
    %22 = vector.shape_cast %21 : vector<1x8x1xf32> to vector<8x1xf32>
    %23 = vector.shape_cast %20 : vector<8x1xf32> to vector<1x8x1xf32>
    tpu.vector_store %arg5[%c0_10, %c0_11, %c0_12], %23 {strides = array<i32>} : memref<1x8x1xf32, #tpu.memory_space<vmem>>, vector<1x8x1xf32>,
    return
  }
  func.func @transform_0(%arg0: i32, %arg1: i32, %arg2: i32) -> (i32, i32, i32) {
    %c0_i32 = arith.constant 0 : i32
    return %arg0, %arg1, %arg2 : i32, i32, i32
  }
  func.func @transform_1(%arg0: i32, %arg1: i32, %arg2: i32) -> (i32, i32, i32) {
    %c0_i32 = arith.constant 0 : i32
    %c0_i32_0 = arith.constant 0 : i32
    return %arg0, %arg1, %c0_i32 : i32, i32, i32
  }
  func.func @transform_2(%arg0: i32, %arg1: i32, %arg2: i32) -> (i32, i32, i32) {
    %c0_i32 = arith.constant 0 : i32
    %c0_i32_0 = arith.constant 0 : i32
    return %arg0, %arg1, %c0_i32 : i32, i32, i32
  }
}

</mosaic_0001>

<llo_original>
// kernel: tpu_custom_call.1
$region0: #{tpu_custom_call.1}
  #allocation0 [shape = 'u32[]', space=smem, size = 0x4, offset = 0x4, fixed_abs, tag = 'smem constant byte address 0x4 - core index']
  #allocation1 [shape = 'u32[144,128]{1,0:T(1,128)}', space=vmem, size = 0x12000, scoped, tag = 'internal scratch']
  %s0 = inlined_call_operand.vmem [shape: f32[2,8,32], index: 0, kind: input, shape index: {}]
  %s1 = inlined_call_operand.vmem [shape: s32[2,8,1], index: 1, kind: input, shape index: {}]
  %s2 = inlined_call_operand.vmem [shape: f32[2,8,1], index: 2, kind: output, shape index: {}]
  %s3 = sld [smem:[#allocation0]]
  $region45: #{tpu_custom_call.1} parent=0
    _
  %s5 = ssub.s32 1, %s3
  %s6 = scalar_select 0, %s5, %s3
  loop: start=0, step=1, limit=4
  $region2: #{tpu_custom_call.1} parent=0 // loop_pre_header
    _
  $region3: #{tpu_custom_call.1} parent=0 // loop_header
    %s8 = sphi 0, %s12
    %p9 = scmp.ge.s32.totalorder %s8, 4
    %s15 = sphi 0, %s34
    %s16 = sphi 0, %s30
    %s17 = sphi 0, %s26
    %s18 = sphi 0, %s15
    %s19 = sphi 0, %s16
    %s20 = sphi 0, %s17
    %s21 = sphi 0, %s18
    %s22 = sphi 0, %s19
    %s23 = sphi 0, %s20
    %s41 = sphi 0, %s43
    %s44 = sphi 0, %s41
    %s45 = sphi 0, %s44
    %s61 = sphi 0, %s45
    %s69 = sphi 0, %s71
    %s72 = sphi 0, %s69
    %s73 = sphi 0, %s72
    %s89 = sphi 0, %s73
    %s97 = sphi 0, %s99
    %s100 = sphi 0, %s97
    %s101 = sphi 0, %s100
    %s117 = sphi 0, %s101
  $region4: #{tpu_custom_call.1} parent=0 // loop_header_branch
    %11 = sbr.rel (%p9) target = $region8
  $region5: #{tpu_custom_call.1} parent=0 // loop_body
    %s13 = ssub.s32 %s8, 1
    %s14 = ssub.s32 %s8, 2
    %s24 = sadd.s32 1, %s17
    %p25 = scmp.ge.s32.totalorder %s24, 1
    %s26 = scalar_select %p25, 0, %s24
    %s27 = sadd.s32 1, %s16
    %s28 = scalar_select %p25, %s27, %s16
    %p29 = scmp.ge.s32.totalorder %s28, 1
    %s30 = scalar_select %p29, 0, %s28
    %s31 = sadd.s32 1, %s15
    %s32 = scalar_select %p29, %s31, %s15
    %p33 = scmp.ge.s32.totalorder %s32, 2
    %s34 = scalar_select %p33, 0, %s32
    %s35 = ssub.s32 %s15, %s34
    %s36 = ssub.s32 %s16, %s30
    %s37 = sor.u32 %s35, %s36
    %s38 = ssub.s32 %s17, %s26
    %s39 = sor.u32 %s37, %s38
    %p40 = scmp.eq.s32.totalorder %s39, 0
    %s42 = sadd.s32 %s41, 1
    %s43 = scalar_select %p40, %s41, %s42
    %p46 = pneg %p40
    %p47 = scmp.eq.s32.totalorder %s8, 1
    %p48 = por %p46, %p47
    %p49 = scmp.ne.s32.totalorder %s41, %s44
    %p50 = scmp.eq.s32.totalorder %s8, 0
    %p51 = por %p49, %p50
    %p52 = scmp.ne.s32.totalorder %s41, %s44
    %p53 = scmp.eq.s32.totalorder %s13, 1
    %p54 = por %p52, %p53
    %p55 = scmp.ne.s32.totalorder %s44, %s45
    %p56 = scmp.eq.s32.totalorder %s13, 0
    %p57 = por %p55, %p56
    %p58 = scmp.ne.s32.totalorder %s44, %s45
    %p59 = scmp.eq.s32.totalorder %s14, 1
    %p60 = por %p58, %p59
    %p62 = scmp.ne.s32.totalorder %s45, %s61
    %p63 = scmp.eq.s32.totalorder %s14, 0
    %p64 = por %p62, %p63
    %s65 = ssub.s32 %s15, %s34
    %s66 = ssub.s32 %s16, %s30
    %s67 = sor.u32 %s65, %s66
    %p68 = scmp.eq.s32.totalorder %s67, 0
    %s70 = sadd.s32 %s69, 1
    %s71 = scalar_select %p68, %s69, %s70
    %p74 = pneg %p68
    %p75 = scmp.eq.s32.totalorder %s8, 1
    %p76 = por %p74, %p75
    %p77 = scmp.ne.s32.totalorder %s69, %s72
    %p78 = scmp.eq.s32.totalorder %s8, 0
    %p79 = por %p77, %p78
    %p80 = scmp.ne.s32.totalorder %s69, %s72
    %p81 = scmp.eq.s32.totalorder %s13, 1
    %p82 = por %p80, %p81
    %p83 = scmp.ne.s32.totalorder %s72, %s73
    %p84 = scmp.eq.s32.totalorder %s13, 0
    %p85 = por %p83, %p84
    %p86 = scmp.ne.s32.totalorder %s72, %s73
    %p87 = scmp.eq.s32.totalorder %s14, 1
    %p88 = por %p86, %p87
    %p90 = scmp.ne.s32.totalorder %s73, %s89
    %p91 = scmp.eq.s32.totalorder %s14, 0
    %p92 = por %p90, %p91
    %s93 = ssub.s32 %s15, %s34
    %s94 = ssub.s32 %s16, %s30
    %s95 = sor.u32 %s93, %s94
    %p96 = scmp.eq.s32.totalorder %s95, 0
    %s98 = sadd.s32 %s97, 1
    %s99 = scalar_select %p96, %s97, %s98
    %p102 = pneg %p96
    %p103 = scmp.eq.s32.totalorder %s8, 1
    %p104 = por %p102, %p103
    %p105 = scmp.ne.s32.totalorder %s97, %s100
    %p106 = scmp.eq.s32.totalorder %s8, 0
    %p107 = por %p105, %p106
    %p108 = scmp.ne.s32.totalorder %s97, %s100
    %p109 = scmp.eq.s32.totalorder %s13, 1
    %p110 = por %p108, %p109
    %p111 = scmp.ne.s32.totalorder %s100, %s101
    %p112 = scmp.eq.s32.totalorder %s13, 0
    %p113 = por %p111, %p112
    %p114 = scmp.ne.s32.totalorder %s100, %s101
    %p115 = scmp.eq.s32.totalorder %s14, 1
    %p116 = por %p114, %p115
    %p118 = scmp.ne.s32.totalorder %s101, %s117
    %p119 = scmp.eq.s32.totalorder %s14, 0
    %p120 = por %p118, %p119
    %p121 = scmp.le.s32.totalorder 1, %s8
    %p122 = scmp.lt.s32.totalorder %s8, 3
    %p123 = pnand %p121, %p122
    %p124 = pneg %p123
    // Predicated region
    $region9: #{tpu_custom_call.1} parent=5 // pred_check
      _
    $region10: #{tpu_custom_call.1} parent=5 // pred_check_branch
      %126 = sbr.rel (%p123) target = $region12
    $region11: #{tpu_custom_call.1} parent=5 // pred_region
      %s127 = ssub.s32 %s8, 1
    $region12: #{tpu_custom_call.1} parent=5 // pred_fallthru
      _
    %p128 = scmp.lt.s32.totalorder %s8, 2
    // Predicated region
    $region13: #{tpu_custom_call.1} parent=5 // pred_check
      %p129 = pneg %p128
    $region14: #{tpu_custom_call.1} parent=5 // pred_check_branch
      %131 = sbr.rel (%p129) target = $region16
    $region15: #{tpu_custom_call.1} parent=5 // pred_region
      // Predicated region
      $region17: #{tpu_custom_call.1} parent=15 // pred_check
        %p132 = pneg %p51
      $region18: #{tpu_custom_call.1} parent=15 // pred_check_branch
        %134 = sbr.rel (%p132) target = $region20
      $region19: #{tpu_custom_call.1} parent=15 // pred_region
        %p135 = scmp.lt.s32.totalorder %s15, 1
        %s136 = scalar_select %p135, %s15, 1
        %p137 = scmp.lt.s32.totalorder %s16, 0
        %s138 = scalar_select %p137, %s16, 0
        %p139 = scmp.lt.s32.totalorder %s17, 0
        %s140 = scalar_select %p139, %s17, 0
        %s141 = sadd.s32 %s140, %s138
        %s142 = sadd.s32 %s141, %s136
        %s143 = smul.addr %s142, 8
        %s144 = scalar_lea.vmem %s0, %s143
      $region20: #{tpu_custom_call.1} parent=15 // pred_fallthru
        _
      // Predicated region
      $region21: #{tpu_custom_call.1} parent=15 // pred_check
        %p145 = pneg %p79
      $region22: #{tpu_custom_call.1} parent=15 // pred_check_branch
        %147 = sbr.rel (%p145) target = $region24
      $region23: #{tpu_custom_call.1} parent=15 // pred_region
        %p148 = scmp.lt.s32.totalorder %s15, 1
        %s149 = scalar_select %p148, %s15, 1
        %p150 = scmp.lt.s32.totalorder %s16, 0
        %s151 = scalar_select %p150, %s16, 0
        %s152 = sadd.s32 %s151, %s149
        %s153 = smul.addr %s152, 8
        %s154 = scalar_lea.vmem %s1, %s153
      $region24: #{tpu_custom_call.1} parent=15 // pred_fallthru
        _
    $region16: #{tpu_custom_call.1} parent=5 // pred_fallthru
      _
    %p155 = scmp.le.s32.totalorder 1, %s8
    %p156 = scmp.lt.s32.totalorder %s8, 3
    %p157 = pnand %p155, %p156
    %p158 = pneg %p157
    // Predicated region
    $region25: #{tpu_custom_call.1} parent=5 // pred_check
      _
    $region26: #{tpu_custom_call.1} parent=5 // pred_check_branch
      %160 = sbr.rel (%p157) target = $region28
    $region27: #{tpu_custom_call.1} parent=5 // pred_region
      %s161 = ssub.s32 %s8, 1
      %p162 = scmp.lt.s32.totalorder %s18, 1
      %s163 = scalar_select %p162, %s18, 1
      %p164 = scmp.lt.s32.totalorder %s19, 0
      %s165 = scalar_select %p164, %s19, 0
      %p166 = scmp.lt.s32.totalorder %s20, 0
      %s167 = scalar_select %p166, %s20, 0
      %s168 = sadd.s32 %s167, %s165
      %s169 = sadd.s32 %s168, %s163
      %s170 = smul.addr %s169, 8
      %s171 = scalar_lea.vmem %s0, %s170
      %p172 = pneg %p57
      %p173 = pneg %p54
      %p174 = scmp.lt.s32.totalorder %s18, 1
      %s175 = scalar_select %p174, %s18, 1
      %p176 = scmp.lt.s32.totalorder %s19, 0
      %s177 = scalar_select %p176, %s19, 0
      %s178 = sadd.s32 %s177, %s175
      %s179 = smul.addr %s178, 8
      %s180 = scalar_lea.vmem %s1, %s179
      %p181 = pneg %p85
      %p182 = pneg %p82
      %p183 = pneg %p113
      %p184 = pneg %p110
      %p185 = scmp.lt.s32.totalorder %s18, 1
      %s186 = scalar_select %p185, %s18, 1
      %p187 = scmp.lt.s32.totalorder %s19, 0
      %s188 = scalar_select %p187, %s19, 0
      %s189 = sadd.s32 %s188, %s186
      %s190 = smul.addr %s189, 8
      %s191 = scalar_lea.vmem %s2, %s190
      %p192 = scmp.lt.s32.totalorder %s18, 1
      %s193 = scalar_select %p192, %s18, 1
      %p194 = scmp.lt.s32.totalorder %s19, 0
      %s195 = scalar_select %p194, %s19, 0
      %p196 = scmp.lt.s32.totalorder %s20, 0
      %s197 = scalar_select %p196, %s20, 0
      %s198 = sadd.s32 %s197, %s195
      %s199 = sadd.s32 %s198, %s193
      %s200 = smul.addr %s199, 8
      %s201 = scalar_lea.vmem %s0, %s200
      %p202 = scmp.lt.s32.totalorder %s18, 1
      %s203 = scalar_select %p202, %s18, 1
      %p204 = scmp.lt.s32.totalorder %s19, 0
      %s205 = scalar_select %p204, %s19, 0
      %s206 = sadd.s32 %s205, %s203
      %s207 = smul.addr %s206, 8
      %s208 = scalar_lea.vmem %s1, %s207
      %p209 = scmp.lt.s32.totalorder %s18, 1
      %s210 = scalar_select %p209, %s18, 1
      %p211 = scmp.lt.s32.totalorder %s19, 0
      %s212 = scalar_select %p211, %s19, 0
      %s213 = sadd.s32 %s212, %s210
      %s214 = smul.addr %s213, 8
      %s215 = scalar_lea.vmem %s2, %s214
      %p216 = scmp.eq.s32.totalorder %s20, 0
      // Predicated region
      $region29: #{tpu_custom_call.1} parent=27 // pred_check
        %p217 = pneg %p216
      $region30: #{tpu_custom_call.1} parent=27 // pred_check_branch
        %219 = sbr.rel (%p217) target = $region32
      $region31: #{tpu_custom_call.1} parent=27 // pred_region
        %vm220 = vcmask 7168
        %221 = vst.msk [vmem:[%s215] sm:$0xff] %vm220, 0.0
      $region32: #{tpu_custom_call.1} parent=27 // pred_fallthru
        _
      %v222 = vld [vmem:[%s201] sm:$0xff]
      %v223 = vld [vmem:[%s208] sm:$0xff]
      %s224 = smul.u32 %s20, 32
      %v225 = vstv %s224
      %v226 = vsub.s32 %v223, %v225
      %v227 = vlaneseq
      %v228 = vand.u32 %v227, 127
      %229 = vset.pattern.permute.xlu0 0
      %230 = vperm.xlu0 %229, %v226
      %v231 = vpop.permute.xlu0 %230
      %vm232 = vcmp.eq.s32.totalorder %v228, %v231
      %v233 = vsel %vm232, %v222, 0.0
      %vm234 = vcmask 261120
      %v235 = vsel %vm234, %v233, 0.0
      %236 = vadd.xlane.f32.xlu0 %v235
      %v237 = vpop.xlane.xlu0 %236
      %v238 = vld [vmem:[%s215] sm:$0xff]
      %v239 = vadd.f32 %v238, %v237
      %vm240 = vcmask 7168
      %241 = vst.msk [vmem:[%s215] sm:$0xff] %vm240, %v239
      %p242 = scmp.lt.s32.totalorder %s18, 1
      %s243 = scalar_select %p242, %s18, 1
      %p244 = scmp.lt.s32.totalorder %s19, 0
      %s245 = scalar_select %p244, %s19, 0
      %s246 = sadd.s32 %s245, %s243
      %s247 = smul.addr %s246, 8
      %s248 = scalar_lea.vmem %s2, %s247
      // Predicated region
      $region33: #{tpu_custom_call.1} parent=27 // pred_check
        %p249 = pneg %p110
      $region34: #{tpu_custom_call.1} parent=27 // pred_check_branch
        %251 = sbr.rel (%p249) target = $region36
      $region35: #{tpu_custom_call.1} parent=27 // pred_region
        _
      $region36: #{tpu_custom_call.1} parent=27 // pred_fallthru
        _
    $region28: #{tpu_custom_call.1} parent=5 // pred_fallthru
      _
    %p252 = scmp.le.s32.totalorder 2, %s8
    // Predicated region
    $region37: #{tpu_custom_call.1} parent=5 // pred_check
      %p253 = pneg %p252
    $region38: #{tpu_custom_call.1} parent=5 // pred_check_branch
      %255 = sbr.rel (%p253) target = $region40
    $region39: #{tpu_custom_call.1} parent=5 // pred_region
      %s256 = ssub.s32 %s8, 2
      // Predicated region
      $region41: #{tpu_custom_call.1} parent=39 // pred_check
        %p257 = pneg %p116
      $region42: #{tpu_custom_call.1} parent=39 // pred_check_branch
        %259 = sbr.rel (%p257) target = $region44
      $region43: #{tpu_custom_call.1} parent=39 // pred_region
        %p260 = scmp.lt.s32.totalorder %s21, 1
        %s261 = scalar_select %p260, %s21, 1
        %p262 = scmp.lt.s32.totalorder %s22, 0
        %s263 = scalar_select %p262, %s22, 0
        %s264 = sadd.s32 %s263, %s261
        %s265 = smul.addr %s264, 8
        %s266 = scalar_lea.vmem %s2, %s265
      $region44: #{tpu_custom_call.1} parent=39 // pred_fallthru
        _
    $region40: #{tpu_custom_call.1} parent=5 // pred_fallthru
      _
  $region6: #{tpu_custom_call.1} parent=0 // loop_footer
    %s12 = sadd.s32 1, %s8
  $region7: #{tpu_custom_call.1} parent=0 // loop_footer_branch
    %7 = sbr.rel target = $region3
  $region8: #{tpu_custom_call.1} parent=0 // loop_exit
    _

</llo_original>
